<compile_context>
chip_gen: v6e
topology: v6e:2x2x1
jax: 0.10.0
libtpu: 0.0.40
codegen_flags: <defaults>
</compile_context>

<pallas_src>
import functools

import jax
import jax.numpy as jnp
from jax.experimental import pallas as pl
from jax.experimental.pallas import tpu as pltpu


def _round_up(x: int, m: int) -> int:
    return (x + m - 1) // m * m


def llama_attention_kernel(pos_ref, h_ref, wsum_ref, wout_ref, o_ref):
    # pos_ref:  (tm, 1)   f32   positions tile
    # h_ref:    (tm, D)   bf16  hidden-states tile
    # wsum_ref: (D, D)    bf16  Wq + Wk + Wv, torch [out, in] layout
    # wout_ref: (D, D)    bf16  W_out,        torch [out, in] layout
    # o_ref:    (tm, D)   output tile
    h = h_ref[...]

    # q + k + v = h @ W_sum^T : contract the last dims of both operands
    # (trans_b is native on the MXU); accumulate in f32.
    attn = jax.lax.dot_general(
        h, wsum_ref[...],
        dimension_numbers=(((1,), (1,)), ((), ())),
        preferred_element_type=jnp.float32)

    # (q + pos) + (k + pos) + v  ==  (q + k + v) + 2 * pos.
    # Keep this add in f32 on the VPU (v5e has no bf16 VPU; exact for big positions).
    attn = attn + 2.0 * pos_ref[...]

    # out = attn @ W_out^T, bf16 MXU inputs, f32 accumulation.
    out = jax.lax.dot_general(
        attn.astype(wout_ref.dtype), wout_ref[...],
        dimension_numbers=(((1,), (1,)), ((), ())),
        preferred_element_type=jnp.float32)

    o_ref[...] = out.astype(o_ref.dtype)


@functools.partial(jax.jit, static_argnames=("tm",))
def llama_attention(positions, hidden_states, w_qkv, w_out, *, tm=None):
    """positions: [S] (int or float); hidden_states: [S, D];
    w_qkv: [3*D, D] (torch Linear layout); w_out: [D, D] (torch Linear layout)."""
    S, D = hidden_states.shape

    # Tile selection: big tiles for real sequences (256; use 128 if tuning for
    # v5e's 4x128^2 MXU), single padded tile for tiny S.
    if tm is None:
        tm = 256 if S >= 256 else _round_up(S, 8)
    tm = max(8, min(tm, _round_up(S, 8)))
    S_pad = _round_up(S, tm)

    compute_dtype = jnp.bfloat16
    out_dtype = hidden_states.dtype

    # Pre-sum the three DxD blocks of the QKV weight (exact fold of q+k+v),
    # keep torch [out, in] layout (no transpose), cast MXU operands to bf16.
    w_sum = (w_qkv[:D] + w_qkv[D:2 * D] + w_qkv[2 * D:]).astype(compute_dtype)
    w_out_c = w_out.astype(compute_dtype)
    h = hidden_states.astype(compute_dtype)
    pos2d = positions.astype(jnp.float32).reshape(S, 1)

    if S_pad != S:
        h = jnp.pad(h, ((0, S_pad - S), (0, 0)))
        pos2d = jnp.pad(pos2d, ((0, S_pad - S), (0, 0)))

    grid = (S_pad // tm,)
    out = pl.pallas_call(
        llama_attention_kernel,
        out_shape=jax.ShapeDtypeStruct((S_pad, D), out_dtype),
        grid=grid,
        in_specs=[
            pl.BlockSpec((tm, 1), lambda i: (i, 0)),   # positions tile (f32)
            pl.BlockSpec((tm, D), lambda i: (i, 0)),   # hidden-states tile (bf16)
            pl.BlockSpec((D, D), lambda i: (0, 0)),    # W_sum (resident, tiny at D=128)
            pl.BlockSpec((D, D), lambda i: (0, 0)),    # W_out (resident)
        ],
        out_specs=pl.BlockSpec((tm, D), lambda i: (i, 0)),
        compiler_params=pltpu.CompilerParams(
            dimension_semantics=("parallel",)),
    )(pos2d, h, w_sum, w_out_c)

    return out[:S]


def init_params(key, hidden_size):
    """Deterministic xavier_normal-style init (gain=0.001), matching the module's
    parameter shapes: qkv [3*D, D], out [D, D] (torch Linear [out_features, in_features])."""
    k1, k2 = jax.random.split(key)
    gain = 0.001

    def xavier_normal(k, fan_out, fan_in):
        std = gain * jnp.sqrt(2.0 / (fan_in + fan_out))
        return std * jax.random.normal(k, (fan_out, fan_in), dtype=jnp.float32)

    w_qkv = xavier_normal(k1, 3 * hidden_size, hidden_size)
    w_out = xavier_normal(k2, hidden_size, hidden_size)
    return w_qkv, w_out


def reference(positions, hidden_states, w_qkv, w_out):
    """Pure-f32 reference matching the torch module's op order."""
    qkv = hidden_states @ w_qkv.T
    d = hidden_states.shape[-1]
    q, k, v = qkv[:, :d], qkv[:, d:2 * d], qkv[:, 2 * d:]
    pos = positions.astype(hidden_states.dtype)[:, None]
    attn = (q + pos) + (k + pos) + v
    return attn @ w_out.T


if __name__ == "__main__":
    hidden_size = 128   # LlamaConfig default
    seq_len = 16        # small sequence

    key = jax.random.PRNGKey(0)
    kp, kh = jax.random.split(key)

    w_qkv, w_out = init_params(kp, hidden_size)
    hidden_states = jax.random.normal(kh, (seq_len, hidden_size), dtype=jnp.float32)
    positions = jnp.arange(seq_len, dtype=jnp.int32)

    out = llama_attention(positions, hidden_states, w_qkv, w_out)
    out = jax.block_until_ready(out)

    ref = reference(positions, hidden_states, w_qkv, w_out)
    assert out.shape == (seq_len, hidden_size)
    # bf16 MXU inputs (f32 accumulation) -> compare at bf16-level tolerance.
    assert jnp.allclose(out, ref, atol=5e-4, rtol=2e-2), "mismatch vs reference"

    print("KERNEL_OK")
</pallas_src>

<mosaic_0001>
module attributes {stable_mosaic.version = 11 : i64} {
  func.func @llama_attention_kernel(%arg0: i32, %arg1: memref<16x1xf32, #tpu.memory_space<vmem>>, %arg2: memref<16x128xbf16, #tpu.memory_space<vmem>>, %arg3: memref<128x128xbf16, #tpu.memory_space<vmem>>, %arg4: memref<128x128xbf16, #tpu.memory_space<vmem>>, %arg5: memref<16x128xf32, #tpu.memory_space<vmem>>) attributes {dimension_semantics = [#tpu.dimension_semantics<parallel>], iteration_bounds = array<i64: 1>, scalar_prefetch = 0 : i64, scratch_operands = 0 : i64, tpu.core_type = #tpu.core_type<tc>, window_params = [{transform_indices = @transform_0, window_bounds = array<i64: 16, 1>}, {transform_indices = @transform_1, window_bounds = array<i64: 16, 128>}, {pipeline_mode = #tpu.pipeline_mode<synchronous>, transform_indices = @transform_2, window_bounds = array<i64: 128, 128>}, {pipeline_mode = #tpu.pipeline_mode<synchronous>, transform_indices = @transform_3, window_bounds = array<i64: 128, 128>}, {transform_indices = @transform_4, window_bounds = array<i64: 16, 128>}]} {
    %c0 = arith.constant 0 : index
    %c0_0 = arith.constant 0 : index
    %0 = vector.load %arg2[%c0, %c0_0] : memref<16x128xbf16, #tpu.memory_space<vmem>>, vector<16x128xbf16>
    %c0_1 = arith.constant 0 : index
    %c0_2 = arith.constant 0 : index
    %1 = vector.load %arg3[%c0_1, %c0_2] : memref<128x128xbf16, #tpu.memory_space<vmem>>, vector<128x128xbf16>
    %cst = arith.constant dense<0.000000e+00> : vector<16x128xf32>
    %2 = tpu.matmul %0, %1, %cst {dimension_numbers = #tpu.dot_dimension_numbers<[1], [1], [0], [0], [0, 0, 1, 0], [], []>} : vector<16x128xbf16>, vector<128x128xbf16>, vector<16x128xf32> -> vector<16x128xf32>
    %c0_3 = arith.constant 0 : index
    %c0_4 = arith.constant 0 : index
    %3 = vector.load %arg1[%c0_3, %c0_4] : memref<16x1xf32, #tpu.memory_space<vmem>>, vector<16x1xf32>
    %cst_5 = arith.constant 2.000000e+00 : f32
    %4 = vector.broadcast %cst_5 : f32 to vector<16x1xf32>
    %5 = arith.mulf %4, %3 : vector<16x1xf32>
    %6 = vector.broadcast %5 : vector<16x1xf32> to vector<16x128xf32>
    %7 = arith.addf %2, %6 : vector<16x128xf32>
    %8 = arith.truncf %7 : vector<16x128xf32> to vector<16x128xbf16>
    %c0_6 = arith.constant 0 : index
    %c0_7 = arith.constant 0 : index
    %9 = vector.load %arg4[%c0_6, %c0_7] : memref<128x128xbf16, #tpu.memory_space<vmem>>, vector<128x128xbf16>
    %cst_8 = arith.constant dense<0.000000e+00> : vector<16x128xf32>
    %10 = tpu.matmul %8, %9, %cst_8 {dimension_numbers = #tpu.dot_dimension_numbers<[1], [1], [0], [0], [0, 0, 1, 0], [], []>} : vector<16x128xbf16>, vector<128x128xbf16>, vector<16x128xf32> -> vector<16x128xf32>
    %c0_9 = arith.constant 0 : index
    %c0_10 = arith.constant 0 : index
    %11 = vector.load %arg5[%c0_9, %c0_10] : memref<16x128xf32, #tpu.memory_space<vmem>>, vector<16x128xf32>
    tpu.vector_store %arg5[%c0_9, %c0_10], %10 {strides = array<i32>} : memref<16x128xf32, #tpu.memory_space<vmem>>, vector<16x128xf32>,
    return
  }
  func.func @transform_0(%arg0: i32) -> (i32, i32) {
    %c0_i32 = arith.constant 0 : i32
    %c0_i32_0 = arith.constant 0 : i32
    return %arg0, %c0_i32 : i32, i32
  }
  func.func @transform_1(%arg0: i32) -> (i32, i32) {
    %c0_i32 = arith.constant 0 : i32
    %c0_i32_0 = arith.constant 0 : i32
    return %arg0, %c0_i32 : i32, i32
  }
  func.func @transform_2(%arg0: i32) -> (i32, i32) {
    %c0_i32 = arith.constant 0 : i32
    %c0_i32_0 = arith.constant 0 : i32
    %c0_i32_1 = arith.constant 0 : i32
    return %c0_i32, %c0_i32_0 : i32, i32
  }
  func.func @transform_3(%arg0: i32) -> (i32, i32) {
    %c0_i32 = arith.constant 0 : i32
    %c0_i32_0 = arith.constant 0 : i32
    %c0_i32_1 = arith.constant 0 : i32
    return %c0_i32, %c0_i32_0 : i32, i32
  }
  func.func @transform_4(%arg0: i32) -> (i32, i32) {
    %c0_i32 = arith.constant 0 : i32
    %c0_i32_0 = arith.constant 0 : i32
    return %arg0, %c0_i32 : i32, i32
  }
}

</mosaic_0001>

<llo_original>
// kernel: llama_attention.1
$region0: #{llama_attention.1}
  #allocation0 [shape = 'u32[]', space=smem, size = 0x4, offset = 0x4, fixed_abs, tag = 'smem constant byte address 0x4 - core index']
  #allocation1 [shape = 'u32[144,128]{1,0:T(1,128)}', space=vmem, size = 0x12000, scoped, tag = 'internal scratch']
  %s0 = inlined_call_operand.vmem [shape: f32[16,1], index: 0, kind: input, shape index: {}]
  %s1 = inlined_call_operand.vmem [shape: bf16[16,128], index: 1, kind: input, shape index: {}]
  %s2 = inlined_call_operand.vmem [shape: bf16[128,128], index: 2, kind: input, shape index: {}]
  %s3 = inlined_call_operand.vmem [shape: bf16[128,128], index: 3, kind: input, shape index: {}]
  %s4 = inlined_call_operand.hbm [shape: f32[16,128], index: 4, kind: output, shape index: {}]
  %s5 = sld [smem:[#allocation0]]
  $region26: #{llama_attention.1} parent=0
    _
  %s7 = ssub.s32 1, %s5
  %s8 = scalar_select 0, %s7, %s5
  $region1: #{llama_attention.1} parent=0
    #allocation2 [shape = 'u8[8192]{0}', space=vmem, size = 0x2000, scoped, tag = 'output window, operand 0, single buffered']
    #allocation3 [shape = 's32[1]{0}', space=sflag, size = 0x4, scoped, tag = 'scoped memory for llama_attention.1']
    %9 = vsyncpa [#allocation3], 0
    // Predicated region
    $region2: #{llama_attention.1} parent=1 // pred_check
      _
    $region3: #{llama_attention.1} parent=1 // pred_check_branch
      %11 = sbr.rel (0) target = $region5
    $region4: #{llama_attention.1} parent=1 // pred_region
      _
    $region5: #{llama_attention.1} parent=1 // pred_fallthru
      _
    // Predicated region
    $region6: #{llama_attention.1} parent=1 // pred_check
      _
    $region7: #{llama_attention.1} parent=1 // pred_check_branch
      %13 = sbr.rel (0) target = $region9
    $region8: #{llama_attention.1} parent=1 // pred_region
      _
    $region9: #{llama_attention.1} parent=1 // pred_fallthru
      _
    // Predicated region
    $region10: #{llama_attention.1} parent=1 // pred_check
      _
    $region11: #{llama_attention.1} parent=1 // pred_check_branch
      %15 = sbr.rel (0) target = $region13
    $region12: #{llama_attention.1} parent=1 // pred_region
      _
    $region13: #{llama_attention.1} parent=1 // pred_fallthru
      _
    // Predicated region
    $region14: #{llama_attention.1} parent=1 // pred_check
      _
    $region15: #{llama_attention.1} parent=1 // pred_check_branch
      %17 = sbr.rel (0) target = $region17
    $region16: #{llama_attention.1} parent=1 // pred_region
      _
    $region17: #{llama_attention.1} parent=1 // pred_fallthru
      _
    %v19 = vld [vmem:[%s1] sm:$0xf]
    %v20 = vld [vmem:[%s1 + $0x4] sm:$0xf]
    %v21 = vld [vmem:[%s2] sm:$0xf]
    %v22 = vld [vmem:[%s2 + $0x4] sm:$0xf]
    %v23 = vld [vmem:[%s2 + $0x8] sm:$0xf]
    %v24 = vld [vmem:[%s2 + $0xc] sm:$0xf]
    %v25 = vld [vmem:[%s2 + $0x10] sm:$0xf]
    %v26 = vld [vmem:[%s2 + $0x14] sm:$0xf]
    %v27 = vld [vmem:[%s2 + $0x18] sm:$0xf]
    %v28 = vld [vmem:[%s2 + $0x1c] sm:$0xf]
    %v29 = vld [vmem:[%s2 + $0x20] sm:$0xf]
    %v30 = vld [vmem:[%s2 + $0x24] sm:$0xf]
    %v31 = vld [vmem:[%s2 + $0x28] sm:$0xf]
    %v32 = vld [vmem:[%s2 + $0x2c] sm:$0xf]
    %v33 = vld [vmem:[%s2 + $0x30] sm:$0xf]
    %v34 = vld [vmem:[%s2 + $0x34] sm:$0xf]
    %v35 = vld [vmem:[%s2 + $0x38] sm:$0xf]
    %v36 = vld [vmem:[%s2 + $0x3c] sm:$0xf]
    %v37 = vld [vmem:[%s0] sm:$0xff]
    %v38 = vld [vmem:[%s0 + $0x8] sm:$0xff]
    %v39 = vmul.f32 %v37, 2.0
    %v40 = vmul.f32 %v38, 2.0
    %42 = vset.pattern.permute.xlu0 0
    %43 = vperm.xlu0 %42, %v39
    %v44 = vpop.permute.xlu0 %43
    %47 = vset.pattern.permute.xlu0 0
    %48 = vperm.xlu0 %47, %v40
    %v49 = vpop.permute.xlu0 %48
    %v53 = vunpack.c.l.b16 %v19
    %v54 = vunpack.c.l.b16 %v20
    %v55 = vpack.c.b16 %v54, %v53
    %v73 = vunpack.c.l.b16 %v21
    %v74 = vunpack.c.l.b16 %v22
    %v75 = vunpack.c.l.b16 %v23
    %v76 = vunpack.c.l.b16 %v24
    %v77 = vunpack.c.l.b16 %v25
    %v78 = vunpack.c.l.b16 %v26
    %v79 = vunpack.c.l.b16 %v27
    %v80 = vunpack.c.l.b16 %v28
    %v81 = vunpack.c.l.b16 %v29
    %v82 = vunpack.c.l.b16 %v30
    %v83 = vunpack.c.l.b16 %v31
    %v84 = vunpack.c.l.b16 %v32
    %v85 = vunpack.c.l.b16 %v33
    %v86 = vunpack.c.l.b16 %v34
    %v87 = vunpack.c.l.b16 %v35
    %v88 = vunpack.c.l.b16 %v36
    %v89 = vpack.c.b16 %v74, %v73
    %v90 = vpack.c.b16 %v76, %v75
    %v91 = vpack.c.b16 %v78, %v77
    %v92 = vpack.c.b16 %v80, %v79
    %v93 = vpack.c.b16 %v82, %v81
    %v94 = vpack.c.b16 %v84, %v83
    %v95 = vpack.c.b16 %v86, %v85
    %v96 = vpack.c.b16 %v88, %v87
    %105 = vmatprep.subr.bf16.mxu0 0
    %106 = vmatpush1.bf16.xpose.msra.mxu0 %v96
    %107 = vmatprep.subr.bf16.mxu0 0
    %108 = vmatpush1.bf16.xpose.msra.mxu0 %v95
    %109 = vmatprep.subr.bf16.mxu0 0
    %110 = vmatpush1.bf16.xpose.msra.mxu0 %v94
    %111 = vmatprep.subr.bf16.mxu0 0
    %112 = vmatpush1.bf16.xpose.msra.mxu0 %v93
    %113 = vmatprep.subr.bf16.mxu0 0
    %114 = vmatpush1.bf16.xpose.msra.mxu0 %v92
    %115 = vmatprep.subr.bf16.mxu0 0
    %116 = vmatpush1.bf16.xpose.msra.mxu0 %v91
    %117 = vmatprep.subr.bf16.mxu0 0
    %118 = vmatpush1.bf16.xpose.msra.mxu0 %v90
    %119 = vmatprep.subr.bf16.mxu0 0
    %120 = vmatpush1.bf16.xpose.msra.mxu0 %v89
    %121 = vmatprep.subr.bf16.mxu0 0
    %122 = vmatpush2.bf16.xpose.msra.mxu0 0
    %123 = vmatprep.subr.bf16.mxu0 0
    %124 = vmatpush2.bf16.xpose.msra.mxu0 0
    %125 = vmatprep.subr.bf16.mxu0 0
    %126 = vmatpush2.bf16.xpose.msra.mxu0 0
    %127 = vmatprep.subr.bf16.mxu0 0
    %128 = vmatpush2.bf16.xpose.msra.mxu0 0
    %129 = vmatprep.subr.bf16.mxu0 0
    %130 = vmatpush2.bf16.xpose.msra.mxu0 0
    %131 = vmatprep.subr.bf16.mxu0 0
    %132 = vmatpush2.bf16.xpose.msra.mxu0 0
    %133 = vmatprep.subr.bf16.mxu0 0
    %134 = vmatpush2.bf16.xpose.msra.mxu0 0
    %135 = vmatprep.subr.bf16.mxu0 0
    %136 = vmatpush2.bf16.xpose.msra.mxu0 0
    %137 = vmatprep.mubr.bf16.mxu0 0
    %138 = vmatmul.mubr.bf16.gmra.mxu0 %v55
    %v139 = vpop.f32.mrf.mxu0
    %v140 = vadd.f32 %v44, %v139
    %v141 = vpop.f32.mrf.mxu0
    %v142 = vpop.f32.mrf.mxu0
    %v143 = vadd.f32 %v49, %v142
    %v144 = vpop.f32.mrf.mxu0
    %145 = vdwg.mxu0
    %v146 = vpack.c.bf16 %v143, %v140
    %v147 = vld [vmem:[%s3] sm:$0xf]
    %v148 = vld [vmem:[%s3 + $0x4] sm:$0xf]
    %v149 = vld [vmem:[%s3 + $0x8] sm:$0xf]
    %v150 = vld [vmem:[%s3 + $0xc] sm:$0xf]
    %v151 = vld [vmem:[%s3 + $0x10] sm:$0xf]
    %v152 = vld [vmem:[%s3 + $0x14] sm:$0xf]
    %v153 = vld [vmem:[%s3 + $0x18] sm:$0xf]
    %v154 = vld [vmem:[%s3 + $0x1c] sm:$0xf]
    %v155 = vld [vmem:[%s3 + $0x20] sm:$0xf]
    %v156 = vld [vmem:[%s3 + $0x24] sm:$0xf]
    %v157 = vld [vmem:[%s3 + $0x28] sm:$0xf]
    %v158 = vld [vmem:[%s3 + $0x2c] sm:$0xf]
    %v159 = vld [vmem:[%s3 + $0x30] sm:$0xf]
    %v160 = vld [vmem:[%s3 + $0x34] sm:$0xf]
    %v161 = vld [vmem:[%s3 + $0x38] sm:$0xf]
    %v162 = vld [vmem:[%s3 + $0x3c] sm:$0xf]
    %v179 = vunpack.c.l.b16 %v147
    %v180 = vunpack.c.l.b16 %v148
    %v181 = vunpack.c.l.b16 %v149
    %v182 = vunpack.c.l.b16 %v150
    %v183 = vunpack.c.l.b16 %v151
    %v184 = vunpack.c.l.b16 %v152
    %v185 = vunpack.c.l.b16 %v153
    %v186 = vunpack.c.l.b16 %v154
    %v187 = vunpack.c.l.b16 %v155
    %v188 = vunpack.c.l.b16 %v156
    %v189 = vunpack.c.l.b16 %v157
    %v190 = vunpack.c.l.b16 %v158
    %v191 = vunpack.c.l.b16 %v159
    %v192 = vunpack.c.l.b16 %v160
    %v193 = vunpack.c.l.b16 %v161
    %v194 = vunpack.c.l.b16 %v162
    %v195 = vpack.c.b16 %v180, %v179
    %v196 = vpack.c.b16 %v182, %v181
    %v197 = vpack.c.b16 %v184, %v183
    %v198 = vpack.c.b16 %v186, %v185
    %v199 = vpack.c.b16 %v188, %v187
    %v200 = vpack.c.b16 %v190, %v189
    %v201 = vpack.c.b16 %v192, %v191
    %v202 = vpack.c.b16 %v194, %v193
    %211 = vmatprep.subr.bf16.mxu0 0
    %212 = vmatpush1.bf16.xpose.msra.mxu0 %v202
    %213 = vmatprep.subr.bf16.mxu0 0
    %214 = vmatpush1.bf16.xpose.msra.mxu0 %v201
    %215 = vmatprep.subr.bf16.mxu0 0
    %216 = vmatpush1.bf16.xpose.msra.mxu0 %v200
    %217 = vmatprep.subr.bf16.mxu0 0
    %218 = vmatpush1.bf16.xpose.msra.mxu0 %v199
    %219 = vmatprep.subr.bf16.mxu0 0
    %220 = vmatpush1.bf16.xpose.msra.mxu0 %v198
    %221 = vmatprep.subr.bf16.mxu0 0
    %222 = vmatpush1.bf16.xpose.msra.mxu0 %v197
    %223 = vmatprep.subr.bf16.mxu0 0
    %224 = vmatpush1.bf16.xpose.msra.mxu0 %v196
    %225 = vmatprep.subr.bf16.mxu0 0
    %226 = vmatpush1.bf16.xpose.msra.mxu0 %v195
    %227 = vmatprep.subr.bf16.mxu0 0
    %228 = vmatpush2.bf16.xpose.msra.mxu0 0
    %229 = vmatprep.subr.bf16.mxu0 0
    %230 = vmatpush2.bf16.xpose.msra.mxu0 0
    %231 = vmatprep.subr.bf16.mxu0 0
    %232 = vmatpush2.bf16.xpose.msra.mxu0 0
    %233 = vmatprep.subr.bf16.mxu0 0
    %234 = vmatpush2.bf16.xpose.msra.mxu0 0
    %235 = vmatprep.subr.bf16.mxu0 0
    %236 = vmatpush2.bf16.xpose.msra.mxu0 0
    %237 = vmatprep.subr.bf16.mxu0 0
    %238 = vmatpush2.bf16.xpose.msra.mxu0 0
    %239 = vmatprep.subr.bf16.mxu0 0
    %240 = vmatpush2.bf16.xpose.msra.mxu0 0
    %241 = vmatprep.subr.bf16.mxu0 0
    %242 = vmatpush2.bf16.xpose.msra.mxu0 0
    %243 = vmatprep.mubr.bf16.mxu0 0
    %244 = vmatmul.mubr.bf16.gmra.mxu0 %v146
    %v245 = vpop.f32.mrf.mxu0
    %v246 = vadd.f32 0.0, %v245
    %v247 = vpop.f32.mrf.mxu0
    %v248 = vpop.f32.mrf.mxu0
    %v249 = vadd.f32 0.0, %v248
    %v250 = vpop.f32.mrf.mxu0
    %251 = vdwg.mxu0
    %252 = vst [vmem:[#allocation2] sm:$0xff] %v246
    %253 = vst [vmem:[#allocation2 + $0x8] sm:$0xff] %v249
    // Predicated region
    $region18: #{llama_attention.1} parent=1 // pred_check
      _
    $region19: #{llama_attention.1} parent=1 // pred_check_branch
      %255 = sbr.rel (0) target = $region21
    $region20: #{llama_attention.1} parent=1 // pred_region
      %s257 = ssub.s32 256, 256
      %258 = vsyncadd [#allocation3], %s257
      %s259 = sshll.u32 [#allocation2], 4
      %s260 = int_to_ptr.vmem [resolvable:$true] %s259
      %265 = dma.vmem_to_hbm [thread:$0]  %s260, 256, %s4, [#allocation3], 128, 128, 8
    $region21: #{llama_attention.1} parent=1 // pred_fallthru
      _
    // Predicated region
    $region22: #{llama_attention.1} parent=1 // pred_check
      _
    $region23: #{llama_attention.1} parent=1 // pred_check_branch
      %267 = sbr.rel (0) target = $region25
    $region24: #{llama_attention.1} parent=1 // pred_region
      %268 = dma.done [#allocation3], 256
    $region25: #{llama_attention.1} parent=1 // pred_fallthru
      _
    %269 = vsyncpa [#allocation3], 1

</llo_original>
